<compile_context>
chip_gen: v5e
topology: v5e:2x2
jax: 0.10.0
libtpu: 0.0.40
codegen_flags: <defaults>
</compile_context>

<pallas_src>
import math

import jax
import jax.numpy as jnp
from jax.experimental import pallas as pl
from jax.experimental.pallas import tpu as pltpu

LANE = 128  # TPU vreg lane width


def _round_up(v, m):
    return ((v + m - 1) // m) * m


def _pick_graphs_per_step(bsz, n, target_rows=256):
    """Largest divisor of bsz such that graphs_per_step * n ~<= target_rows."""
    g = max(1, min(bsz, max(1, target_rows // max(n, 1))))
    while bsz % g:
        g -= 1
    return g


# ---------------------------------------------------------------------------
# Pallas kernel: one grid step == one group of G graphs.
#   x_ref   : (G, N, Cin)     node features
#   a_ref   : (G, N, N)       row-normalized adjacency (mean aggregation)
#   w1n/w1r : (Cin, Hp)       SAGE-1 neighbor / root weights (H zero-padded to Hp)
#   b1      : (1, Hp)         f32
#   w2n/w2r : (Hp, Hp)        SAGE-2 neighbor / root weights
#   b2      : (1, Hp)         f32
#   wh      : (Hp, Wp)        fused [W_actor | W_critic | 0-pad], Wp = pad128(Cout+1)
#   bh      : (1, Wp)         f32
#   out_ref : (G*N, Wp)       f32 [logits | values | 0-pad]  (lane-dense, unmasked store)
# ---------------------------------------------------------------------------
def _gnn_actor_critic_kernel(
    x_ref, a_ref,
    w1n_ref, w1r_ref, b1_ref,
    w2n_ref, w2r_ref, b2_ref,
    wh_ref, bh_ref,
    out_ref,
):
    g, n, cin = x_ref.shape
    hp = w1n_ref.shape[1]
    cdt = x_ref.dtype  # MXU operand dtype (float32, or bfloat16 fast path)

    x = x_ref[...]     # (G, N, Cin)
    a = a_ref[...]     # (G, N, N)

    # ---- SAGEConv 1: batched mean aggregation + two accumulating dots ----
    agg1 = jnp.einsum("gij,gjc->gic", a, x,
                      preferred_element_type=jnp.float32)             # (G, N, Cin)
    x2 = x.reshape(g * n, cin)
    agg1_2 = agg1.reshape(g * n, cin).astype(cdt)
    h1 = jnp.maximum(
        jnp.dot(agg1_2, w1n_ref[...], preferred_element_type=jnp.float32)
        + jnp.dot(x2, w1r_ref[...], preferred_element_type=jnp.float32)
        + b1_ref[...],
        0.0,
    )                                                                  # (G*N, Hp) f32
    h1c = h1.astype(cdt)

    # ---- SAGEConv 2 ----
    agg2 = jnp.einsum("gij,gjc->gic", a, h1c.reshape(g, n, hp),
                      preferred_element_type=jnp.float32)              # (G, N, Hp)
    agg2_2 = agg2.reshape(g * n, hp).astype(cdt)
    h2 = jnp.maximum(
        jnp.dot(agg2_2, w2n_ref[...], preferred_element_type=jnp.float32)
        + jnp.dot(h1c, w2r_ref[...], preferred_element_type=jnp.float32)
        + b2_ref[...],
        0.0,
    )                                                                  # (G*N, Hp) f32
    h2c = h2.astype(cdt)

    # ---- fused actor + critic head, lane-dense unmasked store ----
    out_ref[...] = (
        jnp.dot(h2c, wh_ref[...], preferred_element_type=jnp.float32) + bh_ref[...]
    ).astype(out_ref.dtype)


# ---------------------------------------------------------------------------
# Parameter init (mirrors nn.init.xavier_uniform_ / zeros_)
# ---------------------------------------------------------------------------
def _xavier_uniform(key, fan_in, fan_out):
    bound = math.sqrt(6.0 / (fan_in + fan_out))
    # stored as (fan_in, fan_out) so the kernel does  x @ W
    return jax.random.uniform(key, (fan_in, fan_out), jnp.float32, -bound, bound)


def init_params(key, in_channels, hidden_channels, out_channels):
    ks = jax.random.split(key, 6)
    return {
        # SAGEConv1: lin_l (neighbor) + lin_r (root) + bias
        "w1n": _xavier_uniform(ks[0], in_channels, hidden_channels),
        "w1r": _xavier_uniform(ks[1], in_channels, hidden_channels),
        "b1": jnp.zeros((1, hidden_channels), jnp.float32),
        # SAGEConv2
        "w2n": _xavier_uniform(ks[2], hidden_channels, hidden_channels),
        "w2r": _xavier_uniform(ks[3], hidden_channels, hidden_channels),
        "b2": jnp.zeros((1, hidden_channels), jnp.float32),
        # actor head
        "wa": _xavier_uniform(ks[4], hidden_channels, out_channels),
        "ba": jnp.zeros((1, out_channels), jnp.float32),
        # critic head
        "wc": _xavier_uniform(ks[5], hidden_channels, 1),
        "bc": jnp.zeros((1, 1), jnp.float32),
    }


def _pad2(w, rows, cols):
    return jnp.pad(w, ((0, rows - w.shape[0]), (0, cols - w.shape[1])))


def fuse_params(params, out_channels, compute_dtype=jnp.float32):
    """Zero-pad H -> 128 lanes, fuse actor+critic head, cast MXU weight operands.

    Zero padding is exact: padded hidden columns are ReLU(0)=0 and padded weight
    rows multiply those zeros, so results are bit-equal to the unpadded model
    (in f32).  Biases stay f32 (added post f32 accumulation).
    """
    cin, h = params["w1n"].shape
    hp = _round_up(h, LANE)
    wp = _round_up(out_channels + 1, LANE)
    wh = jnp.concatenate([params["wa"], params["wc"]], axis=1)   # (H, Cout+1)
    bh = jnp.concatenate([params["ba"], params["bc"]], axis=1)   # (1, Cout+1)
    return {
        "w1n": _pad2(params["w1n"], cin, hp).astype(compute_dtype),
        "w1r": _pad2(params["w1r"], cin, hp).astype(compute_dtype),
        "b1": _pad2(params["b1"], 1, hp),
        "w2n": _pad2(params["w2n"], hp, hp).astype(compute_dtype),
        "w2r": _pad2(params["w2r"], hp, hp).astype(compute_dtype),
        "b2": _pad2(params["b2"], 1, hp),
        "wh": _pad2(wh, hp, wp).astype(compute_dtype),
        "bh": _pad2(bh, 1, wp),
    }


# ---------------------------------------------------------------------------
# Glue: edge_index -> dense mean-aggregation matrix
# ---------------------------------------------------------------------------
def build_mean_adj(edge_index, num_nodes):
    """A[i, j] = 1/deg_in(i) if there is an edge j -> i (PyG convention:
    edge_index[0]=source, edge_index[1]=target)."""
    src, dst = edge_index[0], edge_index[1]
    a = jnp.zeros((num_nodes, num_nodes), jnp.float32).at[dst, src].add(1.0)
    deg = jnp.sum(a, axis=1, keepdims=True)
    return a / jnp.maximum(deg, 1.0)


# ---------------------------------------------------------------------------
# Batched forward: grid over graph-groups ("parallel"), weights VMEM-resident.
# ---------------------------------------------------------------------------
def gnn_actor_critic_forward_batched(x_b, a_b, fused, out_channels,
                                     compute_dtype=jnp.float32):
    bsz, n, cin = x_b.shape
    hp = fused["w1n"].shape[1]
    wp = fused["wh"].shape[1]
    gpb = _pick_graphs_per_step(bsz, n)      # graphs per grid step
    steps = bsz // gpb
    rows = gpb * n                            # matmul M-dim per step
    esize = jnp.dtype(compute_dtype).itemsize

    x_b = x_b.astype(compute_dtype)
    a_b = a_b.astype(compute_dtype)

    flops_per_step = (
        2 * gpb * n * n * cin            # A @ X
        + 2 * rows * cin * hp * 2        # layer-1 neighbor + root dots
        + 2 * gpb * n * n * hp           # A @ H1
        + 2 * rows * hp * hp * 2         # layer-2 neighbor + root dots
        + 2 * rows * hp * wp             # fused actor/critic head
    )
    weight_bytes = esize * (2 * cin * hp + 2 * hp * hp + hp * wp) + 4 * (2 * hp + wp)
    bytes_accessed = (
        esize * bsz * (n * cin + n * n)  # streamed per-graph inputs
        + 4 * bsz * n * wp               # f32 output slab
        + weight_bytes
    )

    # Deliberate VMEM budget: double-buffered per-step blocks + resident weights
    # + f32 intermediates, with ~8x headroom.  Capped below v7x's 64 MiB physical.
    step_bytes = (
        2 * esize * (rows * cin + gpb * n * n)   # x, A blocks (double-buffered)
        + 2 * 4 * rows * wp                      # out block (double-buffered)
        + weight_bytes
        + 4 * 4 * rows * hp                      # h1 / h2 / agg2 intermediates
    )
    vmem_limit = int(min(64 * 1024 * 1024, max(8 * 1024 * 1024, 8 * step_bytes)))

    out = pl.pallas_call(
        _gnn_actor_critic_kernel,
        out_shape=jax.ShapeDtypeStruct((bsz * n, wp), jnp.float32),
        grid=(steps,),
        in_specs=[
            pl.BlockSpec((gpb, n, cin), lambda b: (b, 0, 0)),   # x  (per graph-group)
            pl.BlockSpec((gpb, n, n), lambda b: (b, 0, 0)),     # A  (per graph-group)
            pl.BlockSpec((cin, hp), lambda b: (0, 0)),          # W1 neighbor (resident)
            pl.BlockSpec((cin, hp), lambda b: (0, 0)),          # W1 root
            pl.BlockSpec((1, hp), lambda b: (0, 0)),            # b1
            pl.BlockSpec((hp, hp), lambda b: (0, 0)),           # W2 neighbor
            pl.BlockSpec((hp, hp), lambda b: (0, 0)),           # W2 root
            pl.BlockSpec((1, hp), lambda b: (0, 0)),            # b2
            pl.BlockSpec((hp, wp), lambda b: (0, 0)),           # fused head W
            pl.BlockSpec((1, wp), lambda b: (0, 0)),            # fused head b
        ],
        out_specs=pl.BlockSpec((rows, wp), lambda b: (b, 0)),
        compiler_params=pltpu.CompilerParams(
            dimension_semantics=("parallel",),
            vmem_limit_bytes=vmem_limit,
        ),
        cost_estimate=pl.CostEstimate(
            flops=int(steps * flops_per_step),
            transcendentals=0,
            bytes_accessed=int(bytes_accessed),
        ),
    )(x_b, a_b,
      fused["w1n"], fused["w1r"], fused["b1"],
      fused["w2n"], fused["w2r"], fused["b2"],
      fused["wh"], fused["bh"])

    out = out.reshape(bsz, n, wp)
    logits = out[:, :, :out_channels]          # (B, N, Cout)
    values = out[:, :, out_channels]           # (B, N)  == critic.squeeze(-1)
    return logits, values


def gnn_actor_critic_forward(x, edge_index, params, out_channels,
                             compute_dtype=jnp.float32):
    """Single-graph convenience wrapper (matches the PyTorch forward signature)."""
    n = x.shape[0]
    a = build_mean_adj(edge_index, n)
    fused = fuse_params(params, out_channels, compute_dtype)
    logits, values = gnn_actor_critic_forward_batched(
        x[None], a[None], fused, out_channels, compute_dtype)
    return logits[0], values[0]


# ---------------------------------------------------------------------------
# Pure-JAX reference (unfused, unpadded) for sanity checking
# ---------------------------------------------------------------------------
def _reference_forward(x, edge_index, params):
    a = build_mean_adj(edge_index, x.shape[0])
    h1 = jnp.maximum(a @ x @ params["w1n"] + x @ params["w1r"] + params["b1"], 0.0)
    h2 = jnp.maximum(a @ h1 @ params["w2n"] + h1 @ params["w2r"] + params["b2"], 0.0)
    logits = h2 @ params["wa"] + params["ba"]
    values = (h2 @ params["wc"] + params["bc"])[:, 0]
    return logits, values


if __name__ == "__main__":
    key = jax.random.PRNGKey(0)
    k_x, k_e, k_p = jax.random.split(key, 3)

    batch = 2
    num_nodes = 16
    in_channels = 8
    hidden_channels = 32
    out_channels = 4
    num_edges = 48

    # deterministic synthetic batch of graphs + node features
    x_b = jax.random.normal(k_x, (batch, num_nodes, in_channels), jnp.float32)
    src = jax.random.randint(k_e, (batch, num_edges), 0, num_nodes)
    dst = jax.random.randint(jax.random.fold_in(k_e, 1), (batch, num_edges), 0, num_nodes)
    edge_index_b = jnp.stack([src, dst], axis=1)   # (B, 2, E), PyG convention

    params = init_params(k_p, in_channels, hidden_channels, out_channels)
    a_b = jax.vmap(build_mean_adj, in_axes=(0, None))(edge_index_b, num_nodes)

    # ---- f32 MXU path (exact vs reference) ----
    fused_f32 = fuse_params(params, out_channels, jnp.float32)
    logits, values = gnn_actor_critic_forward_batched(
        x_b, a_b, fused_f32, out_channels, jnp.float32)
    jax.block_until_ready((logits, values))

    assert logits.shape == (batch, num_nodes, out_channels)
    assert values.shape == (batch, num_nodes)
    for b in range(batch):
        ref_logits, ref_values = _reference_forward(x_b[b], edge_index_b[b], params)
        assert jnp.allclose(logits[b], ref_logits, atol=1e-4, rtol=1e-4)
        assert jnp.allclose(values[b], ref_values, atol=1e-4, rtol=1e-4)

    # ---- single-graph path (original module signature) ----
    lg, vl = gnn_actor_critic_forward(x_b[0], edge_index_b[0], params, out_channels)
    jax.block_until_ready((lg, vl))
    assert jnp.allclose(lg, logits[0], atol=1e-5) and jnp.allclose(vl, values[0], atol=1e-5)

    # ---- bf16 MXU-operand path (v6e / v7x fast path), f32 accumulation ----
    fused_bf16 = fuse_params(params, out_channels, jnp.bfloat16)
    logits16, values16 = gnn_actor_critic_forward_batched(
        x_b, a_b, fused_bf16, out_channels, jnp.bfloat16)
    jax.block_until_ready((logits16, values16))
    assert jnp.allclose(logits16, logits, atol=1.5e-1, rtol=1.5e-1)
    assert jnp.allclose(values16, values, atol=1.5e-1, rtol=1.5e-1)

    print("KERNEL_OK")
</pallas_src>

<mosaic_0001>
module attributes {stable_mosaic.version = 11 : i64} {
  func.func @_gnn_actor_critic_kernel(%arg0: i32, %arg1: memref<2x16x8xf32, #tpu.memory_space<vmem>>, %arg2: memref<2x16x16xf32, #tpu.memory_space<vmem>>, %arg3: memref<8x128xf32, #tpu.memory_space<vmem>>, %arg4: memref<8x128xf32, #tpu.memory_space<vmem>>, %arg5: memref<1x128xf32, #tpu.memory_space<vmem>>, %arg6: memref<128x128xf32, #tpu.memory_space<vmem>>, %arg7: memref<128x128xf32, #tpu.memory_space<vmem>>, %arg8: memref<1x128xf32, #tpu.memory_space<vmem>>, %arg9: memref<128x128xf32, #tpu.memory_space<vmem>>, %arg10: memref<1x128xf32, #tpu.memory_space<vmem>>, %arg11: memref<32x128xf32, #tpu.memory_space<vmem>>) attributes {dimension_semantics = [#tpu.dimension_semantics<parallel>], iteration_bounds = array<i64: 1>, scalar_prefetch = 0 : i64, scratch_operands = 0 : i64, tpu.core_type = #tpu.core_type<tc>, window_params = [{transform_indices = @transform_0, window_bounds = array<i64: 2, 16, 8>}, {transform_indices = @transform_1, window_bounds = array<i64: 2, 16, 16>}, {pipeline_mode = #tpu.pipeline_mode<synchronous>, transform_indices = @transform_2, window_bounds = array<i64: 8, 128>}, {pipeline_mode = #tpu.pipeline_mode<synchronous>, transform_indices = @transform_3, window_bounds = array<i64: 8, 128>}, {pipeline_mode = #tpu.pipeline_mode<synchronous>, transform_indices = @transform_4, window_bounds = array<i64: 1, 128>}, {pipeline_mode = #tpu.pipeline_mode<synchronous>, transform_indices = @transform_5, window_bounds = array<i64: 128, 128>}, {pipeline_mode = #tpu.pipeline_mode<synchronous>, transform_indices = @transform_6, window_bounds = array<i64: 128, 128>}, {pipeline_mode = #tpu.pipeline_mode<synchronous>, transform_indices = @transform_7, window_bounds = array<i64: 1, 128>}, {pipeline_mode = #tpu.pipeline_mode<synchronous>, transform_indices = @transform_8, window_bounds = array<i64: 128, 128>}, {pipeline_mode = #tpu.pipeline_mode<synchronous>, transform_indices = @transform_9, window_bounds = array<i64: 1, 128>}, {transform_indices = @transform_10, window_bounds = array<i64: 32, 128>}]} {
    %c0 = arith.constant 0 : index
    %c0_0 = arith.constant 0 : index
    %c0_1 = arith.constant 0 : index
    %0 = vector.load %arg1[%c0, %c0_0, %c0_1] : memref<2x16x8xf32, #tpu.memory_space<vmem>>, vector<2x16x8xf32>
    %c0_2 = arith.constant 0 : index
    %c0_3 = arith.constant 0 : index
    %c0_4 = arith.constant 0 : index
    %1 = vector.load %arg2[%c0_2, %c0_3, %c0_4] : memref<2x16x16xf32, #tpu.memory_space<vmem>>, vector<2x16x16xf32>
    "tpu.trace_start"() <{level = 10 : i32, message = "gij,gjc->gic"}> : () -> ()
    %cst = arith.constant dense<0.000000e+00> : vector<2x16x8xf32>
    %2 = tpu.matmul %1, %0, %cst {dimension_numbers = #tpu.dot_dimension_numbers<[2], [1], [1], [2], [0, 0, 0, 1, 1, 2], [0], [0]>} : vector<2x16x16xf32>, vector<2x16x8xf32>, vector<2x16x8xf32> -> vector<2x16x8xf32>
    "tpu.trace_stop"() : () -> ()
    %3 = vector.shape_cast %0 : vector<2x16x8xf32> to vector<32x8xf32>
    %4 = vector.shape_cast %2 : vector<2x16x8xf32> to vector<32x8xf32>
    %c0_5 = arith.constant 0 : index
    %c0_6 = arith.constant 0 : index
    %5 = vector.load %arg3[%c0_5, %c0_6] : memref<8x128xf32, #tpu.memory_space<vmem>>, vector<8x128xf32>
    %cst_7 = arith.constant dense<0.000000e+00> : vector<32x128xf32>
    %6 = tpu.matmul %4, %5, %cst_7 {dimension_numbers = #tpu.dot_dimension_numbers<[1], [0], [0], [1], [0, 0, 1, 1], [], []>} : vector<32x8xf32>, vector<8x128xf32>, vector<32x128xf32> -> vector<32x128xf32>
    %c0_8 = arith.constant 0 : index
    %c0_9 = arith.constant 0 : index
    %7 = vector.load %arg4[%c0_8, %c0_9] : memref<8x128xf32, #tpu.memory_space<vmem>>, vector<8x128xf32>
    %cst_10 = arith.constant dense<0.000000e+00> : vector<32x128xf32>
    %8 = tpu.matmul %3, %7, %cst_10 {dimension_numbers = #tpu.dot_dimension_numbers<[1], [0], [0], [1], [0, 0, 1, 1], [], []>} : vector<32x8xf32>, vector<8x128xf32>, vector<32x128xf32> -> vector<32x128xf32>
    %9 = arith.addf %6, %8 : vector<32x128xf32>
    %c0_11 = arith.constant 0 : index
    %c0_12 = arith.constant 0 : index
    %10 = vector.load %arg5[%c0_11, %c0_12] : memref<1x128xf32, #tpu.memory_space<vmem>>, vector<1x128xf32>
    %11 = vector.broadcast %10 : vector<1x128xf32> to vector<32x128xf32>
    %12 = arith.addf %9, %11 : vector<32x128xf32>
    %cst_13 = arith.constant 0.000000e+00 : f32
    %13 = vector.broadcast %cst_13 : f32 to vector<32x128xf32>
    %14 = arith.maximumf %12, %13 : vector<32x128xf32>
    %15 = vector.shape_cast %14 : vector<32x128xf32> to vector<2x16x128xf32>
    "tpu.trace_start"() <{level = 10 : i32, message = "gij,gjc->gic"}> : () -> ()
    %cst_14 = arith.constant dense<0.000000e+00> : vector<2x16x128xf32>
    %16 = tpu.matmul %1, %15, %cst_14 {dimension_numbers = #tpu.dot_dimension_numbers<[2], [1], [1], [2], [0, 0, 0, 1, 1, 2], [0], [0]>} : vector<2x16x16xf32>, vector<2x16x128xf32>, vector<2x16x128xf32> -> vector<2x16x128xf32>
    "tpu.trace_stop"() : () -> ()
    %17 = vector.shape_cast %16 : vector<2x16x128xf32> to vector<32x128xf32>
    %c0_15 = arith.constant 0 : index
    %c0_16 = arith.constant 0 : index
    %18 = vector.load %arg6[%c0_15, %c0_16] : memref<128x128xf32, #tpu.memory_space<vmem>>, vector<128x128xf32>
    %cst_17 = arith.constant dense<0.000000e+00> : vector<32x128xf32>
    %19 = tpu.matmul %17, %18, %cst_17 {dimension_numbers = #tpu.dot_dimension_numbers<[1], [0], [0], [1], [0, 0, 1, 1], [], []>} : vector<32x128xf32>, vector<128x128xf32>, vector<32x128xf32> -> vector<32x128xf32>
    %c0_18 = arith.constant 0 : index
    %c0_19 = arith.constant 0 : index
    %20 = vector.load %arg7[%c0_18, %c0_19] : memref<128x128xf32, #tpu.memory_space<vmem>>, vector<128x128xf32>
    %cst_20 = arith.constant dense<0.000000e+00> : vector<32x128xf32>
    %21 = tpu.matmul %14, %20, %cst_20 {dimension_numbers = #tpu.dot_dimension_numbers<[1], [0], [0], [1], [0, 0, 1, 1], [], []>} : vector<32x128xf32>, vector<128x128xf32>, vector<32x128xf32> -> vector<32x128xf32>
    %22 = arith.addf %19, %21 : vector<32x128xf32>
    %c0_21 = arith.constant 0 : index
    %c0_22 = arith.constant 0 : index
    %23 = vector.load %arg8[%c0_21, %c0_22] : memref<1x128xf32, #tpu.memory_space<vmem>>, vector<1x128xf32>
    %24 = vector.broadcast %23 : vector<1x128xf32> to vector<32x128xf32>
    %25 = arith.addf %22, %24 : vector<32x128xf32>
    %cst_23 = arith.constant 0.000000e+00 : f32
    %26 = vector.broadcast %cst_23 : f32 to vector<32x128xf32>
    %27 = arith.maximumf %25, %26 : vector<32x128xf32>
    %c0_24 = arith.constant 0 : index
    %c0_25 = arith.constant 0 : index
    %28 = vector.load %arg9[%c0_24, %c0_25] : memref<128x128xf32, #tpu.memory_space<vmem>>, vector<128x128xf32>
    %cst_26 = arith.constant dense<0.000000e+00> : vector<32x128xf32>
    %29 = tpu.matmul %27, %28, %cst_26 {dimension_numbers = #tpu.dot_dimension_numbers<[1], [0], [0], [1], [0, 0, 1, 1], [], []>} : vector<32x128xf32>, vector<128x128xf32>, vector<32x128xf32> -> vector<32x128xf32>
    %c0_27 = arith.constant 0 : index
    %c0_28 = arith.constant 0 : index
    %30 = vector.load %arg10[%c0_27, %c0_28] : memref<1x128xf32, #tpu.memory_space<vmem>>, vector<1x128xf32>
    %31 = vector.broadcast %30 : vector<1x128xf32> to vector<32x128xf32>
    %32 = arith.addf %29, %31 : vector<32x128xf32>
    %c0_29 = arith.constant 0 : index
    %c0_30 = arith.constant 0 : index
    %33 = vector.load %arg11[%c0_29, %c0_30] : memref<32x128xf32, #tpu.memory_space<vmem>>, vector<32x128xf32>
    tpu.vector_store %arg11[%c0_29, %c0_30], %32 {strides = array<i32>} : memref<32x128xf32, #tpu.memory_space<vmem>>, vector<32x128xf32>,
    return
  }
  func.func @transform_0(%arg0: i32) -> (i32, i32, i32) {
    %c0_i32 = arith.constant 0 : i32
    %c0_i32_0 = arith.constant 0 : i32
    %c0_i32_1 = arith.constant 0 : i32
    return %arg0, %c0_i32, %c0_i32_0 : i32, i32, i32
  }
  func.func @transform_1(%arg0: i32) -> (i32, i32, i32) {
    %c0_i32 = arith.constant 0 : i32
    %c0_i32_0 = arith.constant 0 : i32
    %c0_i32_1 = arith.constant 0 : i32
    return %arg0, %c0_i32, %c0_i32_0 : i32, i32, i32
  }
  func.func @transform_2(%arg0: i32) -> (i32, i32) {
    %c0_i32 = arith.constant 0 : i32
    %c0_i32_0 = arith.constant 0 : i32
    %c0_i32_1 = arith.constant 0 : i32
    return %c0_i32, %c0_i32_0 : i32, i32
  }
  func.func @transform_3(%arg0: i32) -> (i32, i32) {
    %c0_i32 = arith.constant 0 : i32
    %c0_i32_0 = arith.constant 0 : i32
    %c0_i32_1 = arith.constant 0 : i32
    return %c0_i32, %c0_i32_0 : i32, i32
  }
  func.func @transform_4(%arg0: i32) -> (i32, i32) {
    %c0_i32 = arith.constant 0 : i32
    %c0_i32_0 = arith.constant 0 : i32
    %c0_i32_1 = arith.constant 0 : i32
    return %c0_i32, %c0_i32_0 : i32, i32
  }
  func.func @transform_5(%arg0: i32) -> (i32, i32) {
    %c0_i32 = arith.constant 0 : i32
    %c0_i32_0 = arith.constant 0 : i32
    %c0_i32_1 = arith.constant 0 : i32
    return %c0_i32, %c0_i32_0 : i32, i32
  }
  func.func @transform_6(%arg0: i32) -> (i32, i32) {
    %c0_i32 = arith.constant 0 : i32
    %c0_i32_0 = arith.constant 0 : i32
    %c0_i32_1 = arith.constant 0 : i32
    return %c0_i32, %c0_i32_0 : i32, i32
  }
  func.func @transform_7(%arg0: i32) -> (i32, i32) {
    %c0_i32 = arith.constant 0 : i32
    %c0_i32_0 = arith.constant 0 : i32
    %c0_i32_1 = arith.constant 0 : i32
    return %c0_i32, %c0_i32_0 : i32, i32
  }
  func.func @transform_8(%arg0: i32) -> (i32, i32) {
    %c0_i32 = arith.constant 0 : i32
    %c0_i32_0 = arith.constant 0 : i32
    %c0_i32_1 = arith.constant 0 : i32
    return %c0_i32, %c0_i32_0 : i32, i32
  }
  func.func @transform_9(%arg0: i32) -> (i32, i32) {
    %c0_i32 = arith.constant 0 : i32
    %c0_i32_0 = arith.constant 0 : i32
    %c0_i32_1 = arith.constant 0 : i32
    return %c0_i32, %c0_i32_0 : i32, i32
  }
  func.func @transform_10(%arg0: i32) -> (i32, i32) {
    %c0_i32 = arith.constant 0 : i32
    %c0_i32_0 = arith.constant 0 : i32
    return %arg0, %c0_i32 : i32, i32
  }
}

</mosaic_0001>

<llo_original>
// kernel: tpu_custom_call.1
$region0: #{tpu_custom_call.1}
  #allocation0 [shape = 'u32[]', space=smem, size = 0x4, offset = 0x4, fixed_abs, tag = 'smem constant byte address 0x4 - core index']
  #allocation1 [shape = 'u32[72,128]{1,0:T(1,128)}', space=vmem, size = 0x9000, scoped, tag = 'internal scratch']
  %s0 = inlined_call_operand.vmem [shape: f32[2,16,8], index: 0, kind: input, shape index: {}]
  %s1 = inlined_call_operand.vmem [shape: f32[2,16,16], index: 1, kind: input, shape index: {}]
  %s2 = inlined_call_operand.vmem [shape: f32[8,128], index: 2, kind: input, shape index: {}]
  %s3 = inlined_call_operand.vmem [shape: f32[8,128], index: 3, kind: input, shape index: {}]
  %s4 = inlined_call_operand.vmem [shape: f32[1,128], index: 4, kind: input, shape index: {}]
  %s5 = inlined_call_operand.hbm [shape: f32[128,128], index: 5, kind: input, shape index: {}]
  %s6 = inlined_call_operand.hbm [shape: f32[128,128], index: 6, kind: input, shape index: {}]
  %s7 = inlined_call_operand.vmem [shape: f32[1,128], index: 7, kind: input, shape index: {}]
  %s8 = inlined_call_operand.hbm [shape: f32[128,128], index: 8, kind: input, shape index: {}]
  %s9 = inlined_call_operand.vmem [shape: f32[1,128], index: 9, kind: input, shape index: {}]
  %s10 = inlined_call_operand.hbm [shape: f32[32,128], index: 10, kind: output, shape index: {}]
  %s11 = sld [smem:[#allocation0]]
  $region62: #{tpu_custom_call.1} parent=0
    _
  %s13 = ssub.s32 1, %s11
  %s14 = scalar_select 0, %s13, %s11
  $region1: #{tpu_custom_call.1} parent=0
    #allocation2 [shape = 'u8[65536]{0}', space=vmem, size = 0x10000, scoped, tag = 'input window, operand 5, single buffered']
    #allocation3 [shape = 's32[1]{0}', space=sflag, size = 0x4, scoped, tag = 'scoped memory for tpu_custom_call.1']
    #allocation4 [shape = 's32[1]{0}', space=sflag, size = 0x4, scoped, tag = 'scoped memory for tpu_custom_call.1']
    #allocation5 [shape = 'u8[65536]{0}', space=vmem, size = 0x10000, scoped, tag = 'input window, operand 6, single buffered']
    #allocation6 [shape = 's32[1]{0}', space=sflag, size = 0x4, scoped, tag = 'scoped memory for tpu_custom_call.1']
    #allocation7 [shape = 'u8[65536]{0}', space=vmem, size = 0x10000, scoped, tag = 'input window, operand 8, single buffered']
    #allocation8 [shape = 'u8[16384]{0}', space=vmem, size = 0x4000, scoped, tag = 'output window, operand 0, single buffered']
    %15 = vsyncpa [#allocation3], 0
    %16 = vsyncpa [#allocation6], 0
    %17 = vsyncpa [#allocation4], 0
    // Predicated region
    $region2: #{tpu_custom_call.1} parent=1 // pred_check
      _
    $region3: #{tpu_custom_call.1} parent=1 // pred_check_branch
      %19 = sbr.rel (0) target = $region5
    $region4: #{tpu_custom_call.1} parent=1 // pred_region
      _
    $region5: #{tpu_custom_call.1} parent=1 // pred_fallthru
      _
    // Predicated region
    $region6: #{tpu_custom_call.1} parent=1 // pred_check
      _
    $region7: #{tpu_custom_call.1} parent=1 // pred_check_branch
      %21 = sbr.rel (0) target = $region9
    $region8: #{tpu_custom_call.1} parent=1 // pred_region
      _
    $region9: #{tpu_custom_call.1} parent=1 // pred_fallthru
      _
    // Predicated region
    $region10: #{tpu_custom_call.1} parent=1 // pred_check
      _
    $region11: #{tpu_custom_call.1} parent=1 // pred_check_branch
      %23 = sbr.rel (0) target = $region13
    $region12: #{tpu_custom_call.1} parent=1 // pred_region
      _
    $region13: #{tpu_custom_call.1} parent=1 // pred_fallthru
      _
    // Predicated region
    $region14: #{tpu_custom_call.1} parent=1 // pred_check
      _
    $region15: #{tpu_custom_call.1} parent=1 // pred_check_branch
      %25 = sbr.rel (0) target = $region17
    $region16: #{tpu_custom_call.1} parent=1 // pred_region
      _
    $region17: #{tpu_custom_call.1} parent=1 // pred_fallthru
      _
    // Predicated region
    $region18: #{tpu_custom_call.1} parent=1 // pred_check
      _
    $region19: #{tpu_custom_call.1} parent=1 // pred_check_branch
      %27 = sbr.rel (0) target = $region21
    $region20: #{tpu_custom_call.1} parent=1 // pred_region
      _
    $region21: #{tpu_custom_call.1} parent=1 // pred_fallthru
      _
    // Predicated region
    $region22: #{tpu_custom_call.1} parent=1 // pred_check
      _
    $region23: #{tpu_custom_call.1} parent=1 // pred_check_branch
      %29 = sbr.rel (0) target = $region25
    $region24: #{tpu_custom_call.1} parent=1 // pred_region
      %31 = vsyncadd [#allocation3], 0
      %s32 = sshll.u32 %s5, 4
      %s33 = int_to_ptr.hbm [resolvable:$true] %s32
      %s34 = sshll.u32 [#allocation2], 4
      %s35 = int_to_ptr.vmem [resolvable:$true] %s34
      %40 = dma.hbm_to_vmem [thread:$0]  %s33, 2048, %s35, [#allocation3], 128, 128, 8
    $region25: #{tpu_custom_call.1} parent=1 // pred_fallthru
      _
    // Predicated region
    $region26: #{tpu_custom_call.1} parent=1 // pred_check
      _
    $region27: #{tpu_custom_call.1} parent=1 // pred_check_branch
      %42 = sbr.rel (0) target = $region29
    $region28: #{tpu_custom_call.1} parent=1 // pred_region
      %44 = vsyncadd [#allocation6], 0
      %s45 = sshll.u32 %s6, 4
      %s46 = int_to_ptr.hbm [resolvable:$true] %s45
      %s47 = sshll.u32 [#allocation5], 4
      %s48 = int_to_ptr.vmem [resolvable:$true] %s47
      %53 = dma.hbm_to_vmem [thread:$0]  %s46, 2048, %s48, [#allocation6], 128, 128, 8
    $region29: #{tpu_custom_call.1} parent=1 // pred_fallthru
      _
    // Predicated region
    $region30: #{tpu_custom_call.1} parent=1 // pred_check
      _
    $region31: #{tpu_custom_call.1} parent=1 // pred_check_branch
      %55 = sbr.rel (0) target = $region33
    $region32: #{tpu_custom_call.1} parent=1 // pred_region
      _
    $region33: #{tpu_custom_call.1} parent=1 // pred_fallthru
      _
    // Predicated region
    $region34: #{tpu_custom_call.1} parent=1 // pred_check
      _
    $region35: #{tpu_custom_call.1} parent=1 // pred_check_branch
      %57 = sbr.rel (0) target = $region37
    $region36: #{tpu_custom_call.1} parent=1 // pred_region
      %59 = vsyncadd [#allocation6], 0
      %s60 = sshll.u32 %s8, 4
      %s61 = int_to_ptr.hbm [resolvable:$true] %s60
      %s62 = sshll.u32 [#allocation7], 4
      %s63 = int_to_ptr.vmem [resolvable:$true] %s62
      %68 = dma.hbm_to_vmem [thread:$0]  %s61, 2048, %s63, [#allocation6], 128, 128, 8
    $region37: #{tpu_custom_call.1} parent=1 // pred_fallthru
      _
    // Predicated region
    $region38: #{tpu_custom_call.1} parent=1 // pred_check
      _
    $region39: #{tpu_custom_call.1} parent=1 // pred_check_branch
      %70 = sbr.rel (0) target = $region41
    $region40: #{tpu_custom_call.1} parent=1 // pred_region
      _
    $region41: #{tpu_custom_call.1} parent=1 // pred_fallthru
      _
    // Predicated region
    $region42: #{tpu_custom_call.1} parent=1 // pred_check
      _
    $region43: #{tpu_custom_call.1} parent=1 // pred_check_branch
      %72 = sbr.rel (0) target = $region45
    $region44: #{tpu_custom_call.1} parent=1 // pred_region
      %74 = dma.done [#allocation3], 2048
    $region45: #{tpu_custom_call.1} parent=1 // pred_fallthru
      _
    // Predicated region
    $region46: #{tpu_custom_call.1} parent=1 // pred_check
      _
    $region47: #{tpu_custom_call.1} parent=1 // pred_check_branch
      %76 = sbr.rel (0) target = $region49
    $region48: #{tpu_custom_call.1} parent=1 // pred_region
      %78 = dma.done [#allocation6], 2048
    $region49: #{tpu_custom_call.1} parent=1 // pred_fallthru
      _
    // Predicated region
    $region50: #{tpu_custom_call.1} parent=1 // pred_check
      _
    $region51: #{tpu_custom_call.1} parent=1 // pred_check_branch
      %80 = sbr.rel (0) target = $region53
    $region52: #{tpu_custom_call.1} parent=1 // pred_region
      %82 = dma.done [#allocation6], 2048
    $region53: #{tpu_custom_call.1} parent=1 // pred_fallthru
      _
    %v83 = vld [vmem:[%s0] sm:$0xff]
    %v84 = vld [vmem:[%s0 + $0x8] sm:$0xff]
    %v85 = vld [vmem:[%s0 + $0x10] sm:$0xff]
    %v86 = vld [vmem:[%s0 + $0x18] sm:$0xff]
    %v87 = vld [vmem:[%s1] sm:$0xff]
    %v88 = vld [vmem:[%s1 + $0x8] sm:$0xff]
    %v89 = vld [vmem:[%s1 + $0x10] sm:$0xff]
    %v90 = vld [vmem:[%s1 + $0x18] sm:$0xff]
    %vm91 = vcmask 130048
    %v93 = vsel %vm91, %v87, 0
    %v96 = vsel %vm91, %v88, 0
    %98 = vmatpush.msra.mxu0 0.0
    %99 = vmatpush.msra.mxu0 0.0
    %100 = vmatpush.msra.mxu0 0.0
    %101 = vmatpush.msra.mxu0 0.0
    %102 = vmatpush.msra.mxu0 0.0
    %103 = vmatpush.msra.mxu0 0.0
    %104 = vmatpush.msra.mxu0 0.0
    %105 = vmatpush.msra.mxu0 0.0
    %106 = vmatpush.msra.mxu0 0.0
    %107 = vmatpush.msra.mxu0 0.0
    %108 = vmatpush.msra.mxu0 0.0
    %109 = vmatpush.msra.mxu0 0.0
    %110 = vmatpush.msra.mxu0 0.0
    %111 = vmatpush.msra.mxu0 0.0
    %112 = vmatpush.msra.mxu0 %v84
    %113 = vmatpush.msra.mxu0 %v83
    %114 = vmatmul.f32.gmra.mxu0 %v93
    %v115 = vpop.f32.mrf.mxu0
    %v116 = vadd.f32 0.0, %v115
    %117 = vmatmul.f32.gmra.mxu0 %v96
    %v118 = vpop.f32.mrf.mxu0
    %v119 = vadd.f32 0.0, %v118
    %120 = vdwg.mxu0
    %v122 = vsel %vm91, %v89, 0
    %v125 = vsel %vm91, %v90, 0
    %127 = vmatpush.msra.mxu0 0.0
    %128 = vmatpush.msra.mxu0 0.0
    %129 = vmatpush.msra.mxu0 0.0
    %130 = vmatpush.msra.mxu0 0.0
    %131 = vmatpush.msra.mxu0 0.0
    %132 = vmatpush.msra.mxu0 0.0
    %133 = vmatpush.msra.mxu0 0.0
    %134 = vmatpush.msra.mxu0 0.0
    %135 = vmatpush.msra.mxu0 0.0
    %136 = vmatpush.msra.mxu0 0.0
    %137 = vmatpush.msra.mxu0 0.0
    %138 = vmatpush.msra.mxu0 0.0
    %139 = vmatpush.msra.mxu0 0.0
    %140 = vmatpush.msra.mxu0 0.0
    %141 = vmatpush.msra.mxu0 %v86
    %142 = vmatpush.msra.mxu0 %v85
    %143 = vmatmul.f32.gmra.mxu0 %v122
    %v144 = vpop.f32.mrf.mxu0
    %v145 = vadd.f32 0.0, %v144
    %146 = vmatmul.f32.gmra.mxu0 %v125
    %v147 = vpop.f32.mrf.mxu0
    %v148 = vadd.f32 0.0, %v147
    %149 = vdwg.mxu0
    %v150 = vld [vmem:[%s2] sm:$0xff]
    %v151 = vld [vmem:[%s3] sm:$0xff]
    %vm152 = vcmask 64512
    %v154 = vsel %vm152, %v83, 0
    %v157 = vsel %vm152, %v84, 0
    %v160 = vsel %vm152, %v85, 0
    %v163 = vsel %vm152, %v86, 0
    %165 = vmatpush.msra.mxu0 0.0
    %166 = vmatpush.msra.mxu0 0.0
    %167 = vmatpush.msra.mxu0 0.0
    %168 = vmatpush.msra.mxu0 0.0
    %169 = vmatpush.msra.mxu0 0.0
    %170 = vmatpush.msra.mxu0 0.0
    %171 = vmatpush.msra.mxu0 0.0
    %172 = vmatpush.msra.mxu0 0.0
    %173 = vmatpush.msra.mxu0 0.0
    %174 = vmatpush.msra.mxu0 0.0
    %175 = vmatpush.msra.mxu0 0.0
    %176 = vmatpush.msra.mxu0 0.0
    %177 = vmatpush.msra.mxu0 0.0
    %178 = vmatpush.msra.mxu0 0.0
    %179 = vmatpush.msra.mxu0 0.0
    %180 = vmatpush.msra.mxu0 %v151
    %181 = vmatmul.f32.gmra.mxu0 %v154
    %v182 = vpop.f32.mrf.mxu0
    %v183 = vadd.f32 0.0, %v182
    %184 = vmatmul.f32.gmra.mxu0 %v157
    %v185 = vpop.f32.mrf.mxu0
    %v186 = vadd.f32 0.0, %v185
    %187 = vmatmul.f32.gmra.mxu0 %v160
    %v188 = vpop.f32.mrf.mxu0
    %v189 = vadd.f32 0.0, %v188
    %190 = vmatmul.f32.gmra.mxu0 %v163
    %v191 = vpop.f32.mrf.mxu0
    %v192 = vadd.f32 0.0, %v191
    %193 = vdwg.mxu0
    %v195 = vsel %vm152, %v116, 0
    %v198 = vsel %vm152, %v119, 0
    %v201 = vsel %vm152, %v145, 0
    %v204 = vsel %vm152, %v148, 0
    %206 = vmatpush.msra.mxu0 0.0
    %207 = vmatpush.msra.mxu0 0.0
    %208 = vmatpush.msra.mxu0 0.0
    %209 = vmatpush.msra.mxu0 0.0
    %210 = vmatpush.msra.mxu0 0.0
    %211 = vmatpush.msra.mxu0 0.0
    %212 = vmatpush.msra.mxu0 0.0
    %213 = vmatpush.msra.mxu0 0.0
    %214 = vmatpush.msra.mxu0 0.0
    %215 = vmatpush.msra.mxu0 0.0
    %216 = vmatpush.msra.mxu0 0.0
    %217 = vmatpush.msra.mxu0 0.0
    %218 = vmatpush.msra.mxu0 0.0
    %219 = vmatpush.msra.mxu0 0.0
    %220 = vmatpush.msra.mxu0 0.0
    %221 = vmatpush.msra.mxu0 %v150
    %222 = vmatmul.f32.gmra.mxu0 %v195
    %v223 = vpop.f32.mrf.mxu0
    %v224 = vadd.f32 %v183, %v223
    %225 = vmatmul.f32.gmra.mxu0 %v198
    %v226 = vpop.f32.mrf.mxu0
    %v227 = vadd.f32 %v186, %v226
    %228 = vmatmul.f32.gmra.mxu0 %v201
    %v229 = vpop.f32.mrf.mxu0
    %v230 = vadd.f32 %v189, %v229
    %231 = vmatmul.f32.gmra.mxu0 %v204
    %v232 = vpop.f32.mrf.mxu0
    %v233 = vadd.f32 %v192, %v232
    %234 = vdwg.mxu0
    %v235 = vld [vmem:[%s4] sm:$0x1]
    %v237 = vperm.slane %v235, 0
    %v239 = vadd.f32 %v224, %v237
    %v240 = vadd.f32 %v227, %v237
    %v241 = vadd.f32 %v230, %v237
    %v242 = vadd.f32 %v233, %v237
    %v243 = vmax.f32 %v239, 0.0
    %v244 = vmax.f32 %v240, 0.0
    %v245 = vmax.f32 %v241, 0.0
    %v246 = vmax.f32 %v242, 0.0
    %247 = vmatpush.msra.mxu0 0.0
    %248 = vmatpush.msra.mxu0 0.0
    %249 = vmatpush.msra.mxu0 0.0
    %250 = vmatpush.msra.mxu0 0.0
    %251 = vmatpush.msra.mxu0 0.0
    %252 = vmatpush.msra.mxu0 0.0
    %253 = vmatpush.msra.mxu0 0.0
    %254 = vmatpush.msra.mxu0 0.0
    %255 = vmatpush.msra.mxu0 0.0
    %256 = vmatpush.msra.mxu0 0.0
    %257 = vmatpush.msra.mxu0 0.0
    %258 = vmatpush.msra.mxu0 0.0
    %259 = vmatpush.msra.mxu0 0.0
    %260 = vmatpush.msra.mxu0 0.0
    %261 = vmatpush.msra.mxu0 %v244
    %262 = vmatpush.msra.mxu0 %v243
    %263 = vmatmul.f32.gmra.mxu0 %v93
    %v264 = vpop.f32.mrf.mxu0
    %v265 = vadd.f32 0.0, %v264
    %266 = vmatmul.f32.gmra.mxu0 %v96
    %v267 = vpop.f32.mrf.mxu0
    %v268 = vadd.f32 0.0, %v267
    %269 = vdwg.mxu0
    %270 = vmatpush.msra.mxu0 0.0
    %271 = vmatpush.msra.mxu0 0.0
    %272 = vmatpush.msra.mxu0 0.0
    %273 = vmatpush.msra.mxu0 0.0
    %274 = vmatpush.msra.mxu0 0.0
    %275 = vmatpush.msra.mxu0 0.0
    %276 = vmatpush.msra.mxu0 0.0
    %277 = vmatpush.msra.mxu0 0.0
    %278 = vmatpush.msra.mxu0 0.0
    %279 = vmatpush.msra.mxu0 0.0
    %280 = vmatpush.msra.mxu0 0.0
    %281 = vmatpush.msra.mxu0 0.0
    %282 = vmatpush.msra.mxu0 0.0
    %283 = vmatpush.msra.mxu0 0.0
    %284 = vmatpush.msra.mxu0 %v246
    %285 = vmatpush.msra.mxu0 %v245
    %286 = vmatmul.f32.gmra.mxu0 %v122
    %v287 = vpop.f32.mrf.mxu0
    %v288 = vadd.f32 0.0, %v287
    %289 = vmatmul.f32.gmra.mxu0 %v125
    %v290 = vpop.f32.mrf.mxu0
    %v291 = vadd.f32 0.0, %v290
    %292 = vdwg.mxu0
    %v293 = vld [vmem:[#allocation2] sm:$0xff]
    %v294 = vld [vmem:[#allocation2 + $0x8] sm:$0xff]
    %v295 = vld [vmem:[#allocation2 + $0x10] sm:$0xff]
    %v296 = vld [vmem:[#allocation2 + $0x18] sm:$0xff]
    %v297 = vld [vmem:[#allocation2 + $0x20] sm:$0xff]
    %v298 = vld [vmem:[#allocation2 + $0x28] sm:$0xff]
    %v299 = vld [vmem:[#allocation2 + $0x30] sm:$0xff]
    %v300 = vld [vmem:[#allocation2 + $0x38] sm:$0xff]
    %v301 = vld [vmem:[#allocation2 + $0x40] sm:$0xff]
    %v302 = vld [vmem:[#allocation2 + $0x48] sm:$0xff]
    %v303 = vld [vmem:[#allocation2 + $0x50] sm:$0xff]
    %v304 = vld [vmem:[#allocation2 + $0x58] sm:$0xff]
    %v305 = vld [vmem:[#allocation2 + $0x60] sm:$0xff]
    %v306 = vld [vmem:[#allocation2 + $0x68] sm:$0xff]
    %v307 = vld [vmem:[#allocation2 + $0x70] sm:$0xff]
    %v308 = vld [vmem:[#allocation2 + $0x78] sm:$0xff]
    %v309 = vld [vmem:[#allocation5] sm:$0xff]
    %v310 = vld [vmem:[#allocation5 + $0x8] sm:$0xff]
    %v311 = vld [vmem:[#allocation5 + $0x10] sm:$0xff]
    %v312 = vld [vmem:[#allocation5 + $0x18] sm:$0xff]
    %v313 = vld [vmem:[#allocation5 + $0x20] sm:$0xff]
    %v314 = vld [vmem:[#allocation5 + $0x28] sm:$0xff]
    %v315 = vld [vmem:[#allocation5 + $0x30] sm:$0xff]
    %v316 = vld [vmem:[#allocation5 + $0x38] sm:$0xff]
    %v317 = vld [vmem:[#allocation5 + $0x40] sm:$0xff]
    %v318 = vld [vmem:[#allocation5 + $0x48] sm:$0xff]
    %v319 = vld [vmem:[#allocation5 + $0x50] sm:$0xff]
    %v320 = vld [vmem:[#allocation5 + $0x58] sm:$0xff]
    %v321 = vld [vmem:[#allocation5 + $0x60] sm:$0xff]
    %v322 = vld [vmem:[#allocation5 + $0x68] sm:$0xff]
    %v323 = vld [vmem:[#allocation5 + $0x70] sm:$0xff]
    %v324 = vld [vmem:[#allocation5 + $0x78] sm:$0xff]
    %325 = vmatpush.msra.mxu0 %v324
    %326 = vmatpush.msra.mxu0 %v323
    %327 = vmatpush.msra.mxu0 %v322
    %328 = vmatpush.msra.mxu0 %v321
    %329 = vmatpush.msra.mxu0 %v320
    %330 = vmatpush.msra.mxu0 %v319
    %331 = vmatpush.msra.mxu0 %v318
    %332 = vmatpush.msra.mxu0 %v317
    %333 = vmatpush.msra.mxu0 %v316
    %334 = vmatpush.msra.mxu0 %v315
    %335 = vmatpush.msra.mxu0 %v314
    %336 = vmatpush.msra.mxu0 %v313
    %337 = vmatpush.msra.mxu0 %v312
    %338 = vmatpush.msra.mxu0 %v311
    %339 = vmatpush.msra.mxu0 %v310
    %340 = vmatpush.msra.mxu0 %v309
    %341 = vmatmul.f32.gmra.mxu0 %v243
    %v342 = vpop.f32.mrf.mxu0
    %v343 = vadd.f32 0.0, %v342
    %344 = vmatmul.f32.gmra.mxu0 %v244
    %v345 = vpop.f32.mrf.mxu0
    %v346 = vadd.f32 0.0, %v345
    %347 = vmatmul.f32.gmra.mxu0 %v245
    %v348 = vpop.f32.mrf.mxu0
    %v349 = vadd.f32 0.0, %v348
    %350 = vmatmul.f32.gmra.mxu0 %v246
    %v351 = vpop.f32.mrf.mxu0
    %v352 = vadd.f32 0.0, %v351
    %353 = vdwg.mxu0
    %354 = vmatpush.msra.mxu0 %v308
    %355 = vmatpush.msra.mxu0 %v307
    %356 = vmatpush.msra.mxu0 %v306
    %357 = vmatpush.msra.mxu0 %v305
    %358 = vmatpush.msra.mxu0 %v304
    %359 = vmatpush.msra.mxu0 %v303
    %360 = vmatpush.msra.mxu0 %v302
    %361 = vmatpush.msra.mxu0 %v301
    %362 = vmatpush.msra.mxu0 %v300
    %363 = vmatpush.msra.mxu0 %v299
    %364 = vmatpush.msra.mxu0 %v298
    %365 = vmatpush.msra.mxu0 %v297
    %366 = vmatpush.msra.mxu0 %v296
    %367 = vmatpush.msra.mxu0 %v295
    %368 = vmatpush.msra.mxu0 %v294
    %369 = vmatpush.msra.mxu0 %v293
    %370 = vmatmul.f32.gmra.mxu0 %v265
    %v371 = vpop.f32.mrf.mxu0
    %v372 = vadd.f32 %v343, %v371
    %373 = vmatmul.f32.gmra.mxu0 %v268
    %v374 = vpop.f32.mrf.mxu0
    %v375 = vadd.f32 %v346, %v374
    %376 = vmatmul.f32.gmra.mxu0 %v288
    %v377 = vpop.f32.mrf.mxu0
    %v378 = vadd.f32 %v349, %v377
    %379 = vmatmul.f32.gmra.mxu0 %v291
    %v380 = vpop.f32.mrf.mxu0
    %v381 = vadd.f32 %v352, %v380
    %382 = vdwg.mxu0
    %v383 = vld [vmem:[%s7] sm:$0x1]
    %v385 = vperm.slane %v383, 0
    %v387 = vadd.f32 %v372, %v385
    %v388 = vadd.f32 %v375, %v385
    %v389 = vadd.f32 %v378, %v385
    %v390 = vadd.f32 %v381, %v385
    %v391 = vmax.f32 %v387, 0.0
    %v392 = vmax.f32 %v388, 0.0
    %v393 = vmax.f32 %v389, 0.0
    %v394 = vmax.f32 %v390, 0.0
    %v395 = vld [vmem:[#allocation7] sm:$0xff]
    %v396 = vld [vmem:[#allocation7 + $0x8] sm:$0xff]
    %v397 = vld [vmem:[#allocation7 + $0x10] sm:$0xff]
    %v398 = vld [vmem:[#allocation7 + $0x18] sm:$0xff]
    %v399 = vld [vmem:[#allocation7 + $0x20] sm:$0xff]
    %v400 = vld [vmem:[#allocation7 + $0x28] sm:$0xff]
    %v401 = vld [vmem:[#allocation7 + $0x30] sm:$0xff]
    %v402 = vld [vmem:[#allocation7 + $0x38] sm:$0xff]
    %v403 = vld [vmem:[#allocation7 + $0x40] sm:$0xff]
    %v404 = vld [vmem:[#allocation7 + $0x48] sm:$0xff]
    %v405 = vld [vmem:[#allocation7 + $0x50] sm:$0xff]
    %v406 = vld [vmem:[#allocation7 + $0x58] sm:$0xff]
    %v407 = vld [vmem:[#allocation7 + $0x60] sm:$0xff]
    %v408 = vld [vmem:[#allocation7 + $0x68] sm:$0xff]
    %v409 = vld [vmem:[#allocation7 + $0x70] sm:$0xff]
    %v410 = vld [vmem:[#allocation7 + $0x78] sm:$0xff]
    %v411 = vld [vmem:[%s9] sm:$0x1]
    %v413 = vperm.slane %v411, 0
    %415 = vmatpush.msra.mxu0 %v410
    %416 = vmatpush.msra.mxu0 %v409
    %417 = vmatpush.msra.mxu0 %v408
    %418 = vmatpush.msra.mxu0 %v407
    %419 = vmatpush.msra.mxu0 %v406
    %420 = vmatpush.msra.mxu0 %v405
    %421 = vmatpush.msra.mxu0 %v404
    %422 = vmatpush.msra.mxu0 %v403
    %423 = vmatpush.msra.mxu0 %v402
    %424 = vmatpush.msra.mxu0 %v401
    %425 = vmatpush.msra.mxu0 %v400
    %426 = vmatpush.msra.mxu0 %v399
    %427 = vmatpush.msra.mxu0 %v398
    %428 = vmatpush.msra.mxu0 %v397
    %429 = vmatpush.msra.mxu0 %v396
    %430 = vmatpush.msra.mxu0 %v395
    %431 = vmatmul.f32.gmra.mxu0 %v391
    %v432 = vpop.f32.mrf.mxu0
    %v433 = vadd.f32 %v413, %v432
    %434 = vmatmul.f32.gmra.mxu0 %v392
    %v435 = vpop.f32.mrf.mxu0
    %v436 = vadd.f32 %v413, %v435
    %437 = vmatmul.f32.gmra.mxu0 %v393
    %v438 = vpop.f32.mrf.mxu0
    %v439 = vadd.f32 %v413, %v438
    %440 = vmatmul.f32.gmra.mxu0 %v394
    %v441 = vpop.f32.mrf.mxu0
    %v442 = vadd.f32 %v413, %v441
    %443 = vdwg.mxu0
    %444 = vst [vmem:[#allocation8] sm:$0xff] %v433
    %445 = vst [vmem:[#allocation8 + $0x8] sm:$0xff] %v436
    %446 = vst [vmem:[#allocation8 + $0x10] sm:$0xff] %v439
    %447 = vst [vmem:[#allocation8 + $0x18] sm:$0xff] %v442
    // Predicated region
    $region54: #{tpu_custom_call.1} parent=1 // pred_check
      _
    $region55: #{tpu_custom_call.1} parent=1 // pred_check_branch
      %449 = sbr.rel (0) target = $region57
    $region56: #{tpu_custom_call.1} parent=1 // pred_region
      %451 = vsyncadd [#allocation4], 0
      %s452 = sshll.u32 [#allocation8], 4
      %s453 = int_to_ptr.vmem [resolvable:$true] %s452
      %s454 = sshll.u32 %s10, 4
      %s455 = int_to_ptr.hbm [resolvable:$true] %s454
      %460 = dma.vmem_to_hbm [thread:$0]  %s453, 512, %s455, [#allocation4], 128, 128, 8
    $region57: #{tpu_custom_call.1} parent=1 // pred_fallthru
      _
    // Predicated region
    $region58: #{tpu_custom_call.1} parent=1 // pred_check
      _
    $region59: #{tpu_custom_call.1} parent=1 // pred_check_branch
      %462 = sbr.rel (0) target = $region61
    $region60: #{tpu_custom_call.1} parent=1 // pred_region
      %464 = dma.done [#allocation4], 512
    $region61: #{tpu_custom_call.1} parent=1 // pred_fallthru
      _
    %465 = vsyncpa [#allocation3], 1
    %466 = vsyncpa [#allocation6], 1
    %467 = vsyncpa [#allocation4], 1

</llo_original>
